<compile_context>
chip_gen: v5e
topology: v5e:2x2
jax: 0.10.0
libtpu: 0.0.40
codegen_flags: <defaults>
</compile_context>

<pallas_src>
import jax
import jax.numpy as jnp
from jax import lax
from jax.experimental import pallas as pl
from jax.experimental.pallas import tpu as pltpu


def _round_up(x, m):
    return (x + m - 1) // m * m


def _mlp_kernel(x_ref,
                w0_ref, b0_ref,
                w1_ref, b1_ref,
                w2_ref, b2_ref,
                w3_ref, b3_ref,
                o_ref):
    """(Linear + ReLU) x3 -> Linear on one (tb, d_in) batch tile."""
    h = x_ref[...]

    def hidden(h, w_ref, b_ref):
        acc = jnp.dot(h, w_ref[...], preferred_element_type=jnp.float32)
        acc = acc.astype(b_ref.dtype) + b_ref[...]      # bias + ReLU in eltwise dtype
        return jnp.maximum(acc, 0).astype(w_ref.dtype)  # ready for the next MXU pass

    h = hidden(h, w0_ref, b0_ref)
    # TODO(synk): nn.Dropout omitted -- identity in eval/inference mode.
    h = hidden(h, w1_ref, b1_ref)
    h = hidden(h, w2_ref, b2_ref)
    acc = jnp.dot(h, w3_ref[...], preferred_element_type=jnp.float32) + b3_ref[...]
    o_ref[...] = acc.astype(o_ref.dtype)


def dnn_forward(x, params, *, block_b=2048, param_dtype=jnp.bfloat16):
    """x: (B, 1, D_in) -> (B, D_out) float32.  Weights stored (in, out): y = x @ W + b."""
    x2d = jnp.squeeze(x, axis=1)                       # matches x.squeeze(1)
    B, d_in = x2d.shape
    hidden_dims = [int(w.shape[1]) for w, _ in params[:-1]]
    out_dim = int(params[-1][0].shape[1])

    act_dtype = jnp.dtype(param_dtype)
    x2d = x2d.astype(act_dtype)                        # stream x at weight precision

    # ---- batch tiling: big tiles to amortize per-step overhead; cap so that a
    # single large batch still yields >= 2 tiles (v7x has 2 TensorCores). ------
    if B > block_b:
        tb = block_b
    else:
        half = _round_up(-(-B // 2), 8)
        tb = half if half >= 1024 else _round_up(B, 8)
    tb = max(tb, 8)
    n_blocks = pl.cdiv(B, tb)                          # ragged last tile is fine

    # ---- flatten params: weights in act_dtype, hidden biases in act_dtype,
    # final bias in f32 (final accumulate / store stay f32). -------------------
    flat = []
    n_layers = len(params)
    for li, (w, b) in enumerate(params):
        b_dt = jnp.float32 if li == n_layers - 1 else act_dtype
        flat.append(w.astype(act_dtype))
        flat.append(b.astype(b_dt).reshape(1, -1))     # keep biases 2D for TPU

    const_map = lambda i: (0, 0)                       # resident across grid steps
    in_specs = [pl.BlockSpec((tb, d_in), lambda i: (i, 0))]
    in_specs += [pl.BlockSpec(p.shape, const_map) for p in flat]

    flops = 2 * B * sum(int(w.shape[0]) * int(w.shape[1]) for w, _ in params)
    param_bytes = sum(int(p.size) * p.dtype.itemsize for p in flat)
    bytes_accessed = (int(x2d.size) * x2d.dtype.itemsize
                      + B * out_dim * 4
                      + param_bytes)

    # ---- explicit VMEM budget (double-buffered x/out tiles + resident params
    # + f32-sized layer intermediates), with headroom; capped for v7x (64 MiB). -
    act_bytes = act_dtype.itemsize
    vmem_est = (2 * tb * d_in * act_bytes
                + 2 * tb * out_dim * 4
                + 2 * param_bytes
                + tb * sum(hidden_dims) * 4)
    vmem_limit = int(min(48 << 20, max(4 * vmem_est, 16 << 20)))

    out = pl.pallas_call(
        _mlp_kernel,
        out_shape=jax.ShapeDtypeStruct((B, out_dim), jnp.float32),
        grid=(n_blocks,),
        in_specs=in_specs,
        out_specs=pl.BlockSpec((tb, out_dim), lambda i: (i, 0)),
        compiler_params=pltpu.CompilerParams(
            dimension_semantics=("parallel",),         # v7x: batch tiles across 2 TCs
            vmem_limit_bytes=vmem_limit),
        cost_estimate=pl.CostEstimate(
            flops=flops, transcendentals=0, bytes_accessed=bytes_accessed),
    )(x2d, *flat)

    return out                                         # (B, out_dim), no extra slice


def init_params(key, input_dim, output_dim, hidden_dims=(256, 128, 64)):
    """PyTorch nn.Linear-style init (uniform +-1/sqrt(fan_in)), weights stored (in, out)."""
    dims = [input_dim] + list(hidden_dims) + [output_dim]
    params = []
    for i in range(len(dims) - 1):
        key, kw, kb = jax.random.split(key, 3)
        fan_in, fan_out = dims[i], dims[i + 1]
        bound = 1.0 / jnp.sqrt(jnp.float32(fan_in))
        w = jax.random.uniform(kw, (fan_in, fan_out), jnp.float32,
                               minval=-bound, maxval=bound)
        b = jax.random.uniform(kb, (fan_out,), jnp.float32,
                               minval=-bound, maxval=bound)
        params.append((w, b))
    return params


def _ref_forward(x, params):
    h = jnp.squeeze(x, axis=1)
    for w, b in params[:-1]:
        h = jnp.maximum(jnp.dot(h, w, precision=lax.Precision.HIGHEST) + b, 0.0)
    return jnp.dot(h, params[-1][0], precision=lax.Precision.HIGHEST) + params[-1][1]


if __name__ == "__main__":
    key = jax.random.PRNGKey(0)
    kx, kp, kx2 = jax.random.split(key, 3)

    input_dim, output_dim = 32, 8
    params = init_params(kp, input_dim, output_dim)

    # --- small demo batch, f32 weights/activations: tight correctness check ---
    B = 2
    x_small = jax.random.normal(kx, (B, 1, input_dim), dtype=jnp.float32)
    out_small = dnn_forward(x_small, params, param_dtype=jnp.float32)
    jax.block_until_ready(out_small)
    ref_small = _ref_forward(x_small, params)
    assert out_small.shape == (B, output_dim)
    assert jnp.allclose(out_small, ref_small, atol=1e-3, rtol=1e-3)

    # --- larger, non-tile-aligned batch: multi-step ragged grid + bf16 path ---
    B2 = 300
    x_big = jax.random.normal(kx2, (B2, 1, input_dim), dtype=jnp.float32)
    out_big = dnn_forward(x_big, params, block_b=128)   # bf16 weights/activations
    jax.block_until_ready(out_big)
    ref_big = _ref_forward(x_big, params)
    assert out_big.shape == (B2, output_dim)
    assert jnp.allclose(out_big, ref_big, atol=5e-2, rtol=5e-2)

    print("KERNEL_OK")
</pallas_src>

<mosaic_0001>
module attributes {stable_mosaic.version = 11 : i64} {
  func.func @_mlp_kernel(%arg0: i32, %arg1: memref<8x32xf32, #tpu.memory_space<vmem>>, %arg2: memref<32x256xf32, #tpu.memory_space<vmem>>, %arg3: memref<1x256xf32, #tpu.memory_space<vmem>>, %arg4: memref<256x128xf32, #tpu.memory_space<vmem>>, %arg5: memref<1x128xf32, #tpu.memory_space<vmem>>, %arg6: memref<128x64xf32, #tpu.memory_space<vmem>>, %arg7: memref<1x64xf32, #tpu.memory_space<vmem>>, %arg8: memref<64x8xf32, #tpu.memory_space<vmem>>, %arg9: memref<1x8xf32, #tpu.memory_space<vmem>>, %arg10: memref<8x8xf32, #tpu.memory_space<vmem>>) attributes {dimension_semantics = [#tpu.dimension_semantics<parallel>], iteration_bounds = array<i64: 1>, scalar_prefetch = 0 : i64, scratch_operands = 0 : i64, tpu.core_type = #tpu.core_type<tc>, window_params = [{transform_indices = @transform_0, window_bounds = array<i64: 8, 32>}, {pipeline_mode = #tpu.pipeline_mode<synchronous>, transform_indices = @transform_1, window_bounds = array<i64: 32, 256>}, {pipeline_mode = #tpu.pipeline_mode<synchronous>, transform_indices = @transform_2, window_bounds = array<i64: 1, 256>}, {pipeline_mode = #tpu.pipeline_mode<synchronous>, transform_indices = @transform_3, window_bounds = array<i64: 256, 128>}, {pipeline_mode = #tpu.pipeline_mode<synchronous>, transform_indices = @transform_4, window_bounds = array<i64: 1, 128>}, {pipeline_mode = #tpu.pipeline_mode<synchronous>, transform_indices = @transform_5, window_bounds = array<i64: 128, 64>}, {pipeline_mode = #tpu.pipeline_mode<synchronous>, transform_indices = @transform_6, window_bounds = array<i64: 1, 64>}, {pipeline_mode = #tpu.pipeline_mode<synchronous>, transform_indices = @transform_7, window_bounds = array<i64: 64, 8>}, {pipeline_mode = #tpu.pipeline_mode<synchronous>, transform_indices = @transform_8, window_bounds = array<i64: 1, 8>}, {transform_indices = @transform_9, window_bounds = array<i64: 8, 8>}]} {
    %c0 = arith.constant 0 : index
    %c0_0 = arith.constant 0 : index
    %0 = vector.load %arg1[%c0, %c0_0] : memref<8x32xf32, #tpu.memory_space<vmem>>, vector<8x32xf32>
    %c0_1 = arith.constant 0 : index
    %c0_2 = arith.constant 0 : index
    %1 = vector.load %arg2[%c0_1, %c0_2] : memref<32x256xf32, #tpu.memory_space<vmem>>, vector<32x256xf32>
    %cst = arith.constant dense<0.000000e+00> : vector<8x256xf32>
    %2 = tpu.matmul %0, %1, %cst {dimension_numbers = #tpu.dot_dimension_numbers<[1], [0], [0], [1], [0, 0, 1, 1], [], []>} : vector<8x32xf32>, vector<32x256xf32>, vector<8x256xf32> -> vector<8x256xf32>
    %c0_3 = arith.constant 0 : index
    %c0_4 = arith.constant 0 : index
    %3 = vector.load %arg3[%c0_3, %c0_4] : memref<1x256xf32, #tpu.memory_space<vmem>>, vector<1x256xf32>
    %4 = vector.broadcast %3 : vector<1x256xf32> to vector<8x256xf32>
    %5 = arith.addf %2, %4 : vector<8x256xf32>
    %cst_5 = arith.constant 0.000000e+00 : f32
    %6 = vector.broadcast %cst_5 : f32 to vector<8x256xf32>
    %7 = arith.maximumf %5, %6 : vector<8x256xf32>
    %c0_6 = arith.constant 0 : index
    %c0_7 = arith.constant 0 : index
    %8 = vector.load %arg4[%c0_6, %c0_7] : memref<256x128xf32, #tpu.memory_space<vmem>>, vector<256x128xf32>
    %cst_8 = arith.constant dense<0.000000e+00> : vector<8x128xf32>
    %9 = tpu.matmul %7, %8, %cst_8 {dimension_numbers = #tpu.dot_dimension_numbers<[1], [0], [0], [1], [0, 0, 1, 1], [], []>} : vector<8x256xf32>, vector<256x128xf32>, vector<8x128xf32> -> vector<8x128xf32>
    %c0_9 = arith.constant 0 : index
    %c0_10 = arith.constant 0 : index
    %10 = vector.load %arg5[%c0_9, %c0_10] : memref<1x128xf32, #tpu.memory_space<vmem>>, vector<1x128xf32>
    %11 = vector.broadcast %10 : vector<1x128xf32> to vector<8x128xf32>
    %12 = arith.addf %9, %11 : vector<8x128xf32>
    %cst_11 = arith.constant 0.000000e+00 : f32
    %13 = vector.broadcast %cst_11 : f32 to vector<8x128xf32>
    %14 = arith.maximumf %12, %13 : vector<8x128xf32>
    %c0_12 = arith.constant 0 : index
    %c0_13 = arith.constant 0 : index
    %15 = vector.load %arg6[%c0_12, %c0_13] : memref<128x64xf32, #tpu.memory_space<vmem>>, vector<128x64xf32>
    %cst_14 = arith.constant dense<0.000000e+00> : vector<8x64xf32>
    %16 = tpu.matmul %14, %15, %cst_14 {dimension_numbers = #tpu.dot_dimension_numbers<[1], [0], [0], [1], [0, 0, 1, 1], [], []>} : vector<8x128xf32>, vector<128x64xf32>, vector<8x64xf32> -> vector<8x64xf32>
    %c0_15 = arith.constant 0 : index
    %c0_16 = arith.constant 0 : index
    %17 = vector.load %arg7[%c0_15, %c0_16] : memref<1x64xf32, #tpu.memory_space<vmem>>, vector<1x64xf32>
    %18 = vector.broadcast %17 : vector<1x64xf32> to vector<8x64xf32>
    %19 = arith.addf %16, %18 : vector<8x64xf32>
    %cst_17 = arith.constant 0.000000e+00 : f32
    %20 = vector.broadcast %cst_17 : f32 to vector<8x64xf32>
    %21 = arith.maximumf %19, %20 : vector<8x64xf32>
    %c0_18 = arith.constant 0 : index
    %c0_19 = arith.constant 0 : index
    %22 = vector.load %arg8[%c0_18, %c0_19] : memref<64x8xf32, #tpu.memory_space<vmem>>, vector<64x8xf32>
    %cst_20 = arith.constant dense<0.000000e+00> : vector<8x8xf32>
    %23 = tpu.matmul %21, %22, %cst_20 {dimension_numbers = #tpu.dot_dimension_numbers<[1], [0], [0], [1], [0, 0, 1, 1], [], []>} : vector<8x64xf32>, vector<64x8xf32>, vector<8x8xf32> -> vector<8x8xf32>
    %c0_21 = arith.constant 0 : index
    %c0_22 = arith.constant 0 : index
    %24 = vector.load %arg9[%c0_21, %c0_22] : memref<1x8xf32, #tpu.memory_space<vmem>>, vector<1x8xf32>
    %25 = vector.broadcast %24 : vector<1x8xf32> to vector<8x8xf32>
    %26 = arith.addf %23, %25 : vector<8x8xf32>
    %c0_23 = arith.constant 0 : index
    %c0_24 = arith.constant 0 : index
    %27 = vector.load %arg10[%c0_23, %c0_24] : memref<8x8xf32, #tpu.memory_space<vmem>>, vector<8x8xf32>
    tpu.vector_store %arg10[%c0_23, %c0_24], %26 {strides = array<i32>} : memref<8x8xf32, #tpu.memory_space<vmem>>, vector<8x8xf32>,
    return
  }
  func.func @transform_0(%arg0: i32) -> (i32, i32) {
    %c0_i32 = arith.constant 0 : i32
    %c0_i32_0 = arith.constant 0 : i32
    return %arg0, %c0_i32 : i32, i32
  }
  func.func @transform_1(%arg0: i32) -> (i32, i32) {
    %c0_i32 = arith.constant 0 : i32
    %c0_i32_0 = arith.constant 0 : i32
    %c0_i32_1 = arith.constant 0 : i32
    return %c0_i32, %c0_i32_0 : i32, i32
  }
  func.func @transform_2(%arg0: i32) -> (i32, i32) {
    %c0_i32 = arith.constant 0 : i32
    %c0_i32_0 = arith.constant 0 : i32
    %c0_i32_1 = arith.constant 0 : i32
    return %c0_i32, %c0_i32_0 : i32, i32
  }
  func.func @transform_3(%arg0: i32) -> (i32, i32) {
    %c0_i32 = arith.constant 0 : i32
    %c0_i32_0 = arith.constant 0 : i32
    %c0_i32_1 = arith.constant 0 : i32
    return %c0_i32, %c0_i32_0 : i32, i32
  }
  func.func @transform_4(%arg0: i32) -> (i32, i32) {
    %c0_i32 = arith.constant 0 : i32
    %c0_i32_0 = arith.constant 0 : i32
    %c0_i32_1 = arith.constant 0 : i32
    return %c0_i32, %c0_i32_0 : i32, i32
  }
  func.func @transform_5(%arg0: i32) -> (i32, i32) {
    %c0_i32 = arith.constant 0 : i32
    %c0_i32_0 = arith.constant 0 : i32
    %c0_i32_1 = arith.constant 0 : i32
    return %c0_i32, %c0_i32_0 : i32, i32
  }
  func.func @transform_6(%arg0: i32) -> (i32, i32) {
    %c0_i32 = arith.constant 0 : i32
    %c0_i32_0 = arith.constant 0 : i32
    %c0_i32_1 = arith.constant 0 : i32
    return %c0_i32, %c0_i32_0 : i32, i32
  }
  func.func @transform_7(%arg0: i32) -> (i32, i32) {
    %c0_i32 = arith.constant 0 : i32
    %c0_i32_0 = arith.constant 0 : i32
    %c0_i32_1 = arith.constant 0 : i32
    return %c0_i32, %c0_i32_0 : i32, i32
  }
  func.func @transform_8(%arg0: i32) -> (i32, i32) {
    %c0_i32 = arith.constant 0 : i32
    %c0_i32_0 = arith.constant 0 : i32
    %c0_i32_1 = arith.constant 0 : i32
    return %c0_i32, %c0_i32_0 : i32, i32
  }
  func.func @transform_9(%arg0: i32) -> (i32, i32) {
    %c0_i32 = arith.constant 0 : i32
    %c0_i32_0 = arith.constant 0 : i32
    return %arg0, %c0_i32 : i32, i32
  }
}

</mosaic_0001>

<llo_original>
// kernel: tpu_custom_call.1
$region0: #{tpu_custom_call.1}
  #allocation0 [shape = 'u32[]', space=smem, size = 0x4, offset = 0x4, fixed_abs, tag = 'smem constant byte address 0x4 - core index']
  #allocation1 [shape = 'u32[72,128]{1,0:T(1,128)}', space=vmem, size = 0x9000, scoped, tag = 'internal scratch']
  %s0 = inlined_call_operand.vmem [shape: f32[2,32], index: 0, kind: input, shape index: {}]
  %s1 = inlined_call_operand.hbm [shape: f32[32,256], index: 1, kind: input, shape index: {}]
  %s2 = inlined_call_operand.vmem [shape: f32[1,256], index: 2, kind: input, shape index: {}]
  %s3 = inlined_call_operand.vmem [shape: f32[256,128], index: 3, kind: input, shape index: {}]
  %s4 = inlined_call_operand.vmem [shape: f32[1,128], index: 4, kind: input, shape index: {}]
  %s5 = inlined_call_operand.vmem [shape: f32[128,64], index: 5, kind: input, shape index: {}]
  %s6 = inlined_call_operand.vmem [shape: f32[1,64], index: 6, kind: input, shape index: {}]
  %s7 = inlined_call_operand.vmem [shape: f32[64,8], index: 7, kind: input, shape index: {}]
  %s8 = inlined_call_operand.vmem [shape: f32[1,8], index: 8, kind: input, shape index: {}]
  %s9 = inlined_call_operand.hbm [shape: f32[2,8], index: 9, kind: output, shape index: {}]
  %s10 = sld [smem:[#allocation0]]
  $region50: #{tpu_custom_call.1} parent=0
    _
  %s12 = ssub.s32 1, %s10
  %s13 = scalar_select 0, %s12, %s10
  $region1: #{tpu_custom_call.1} parent=0
    #allocation2 [shape = 'u8[32768]{0}', space=vmem, size = 0x8000, scoped, tag = 'input window, operand 1, single buffered']
    #allocation3 [shape = 's32[1]{0}', space=sflag, size = 0x4, scoped, tag = 'scoped memory for tpu_custom_call.1']
    #allocation4 [shape = 's32[1]{0}', space=sflag, size = 0x4, scoped, tag = 'scoped memory for tpu_custom_call.1']
    #allocation5 [shape = 'u8[4096]{0}', space=vmem, size = 0x1000, scoped, tag = 'output window, operand 0, single buffered']
    %14 = vsyncpa [#allocation3], 0
    %15 = vsyncpa [#allocation4], 0
    // Predicated region
    $region2: #{tpu_custom_call.1} parent=1 // pred_check
      _
    $region3: #{tpu_custom_call.1} parent=1 // pred_check_branch
      %17 = sbr.rel (0) target = $region5
    $region4: #{tpu_custom_call.1} parent=1 // pred_region
      _
    $region5: #{tpu_custom_call.1} parent=1 // pred_fallthru
      _
    // Predicated region
    $region6: #{tpu_custom_call.1} parent=1 // pred_check
      _
    $region7: #{tpu_custom_call.1} parent=1 // pred_check_branch
      %19 = sbr.rel (0) target = $region9
    $region8: #{tpu_custom_call.1} parent=1 // pred_region
      %21 = vsyncadd [#allocation3], 0
      %s22 = sshll.u32 %s1, 4
      %s23 = int_to_ptr.hbm [resolvable:$true] %s22
      %s24 = sshll.u32 [#allocation2], 4
      %s25 = int_to_ptr.vmem [resolvable:$true] %s24
      %30 = dma.hbm_to_vmem [thread:$0]  %s23, 1024, %s25, [#allocation3], 256, 256, 16
    $region9: #{tpu_custom_call.1} parent=1 // pred_fallthru
      _
    // Predicated region
    $region10: #{tpu_custom_call.1} parent=1 // pred_check
      _
    $region11: #{tpu_custom_call.1} parent=1 // pred_check_branch
      %32 = sbr.rel (0) target = $region13
    $region12: #{tpu_custom_call.1} parent=1 // pred_region
      _
    $region13: #{tpu_custom_call.1} parent=1 // pred_fallthru
      _
    // Predicated region
    $region14: #{tpu_custom_call.1} parent=1 // pred_check
      _
    $region15: #{tpu_custom_call.1} parent=1 // pred_check_branch
      %34 = sbr.rel (0) target = $region17
    $region16: #{tpu_custom_call.1} parent=1 // pred_region
      _
    $region17: #{tpu_custom_call.1} parent=1 // pred_fallthru
      _
    // Predicated region
    $region18: #{tpu_custom_call.1} parent=1 // pred_check
      _
    $region19: #{tpu_custom_call.1} parent=1 // pred_check_branch
      %36 = sbr.rel (0) target = $region21
    $region20: #{tpu_custom_call.1} parent=1 // pred_region
      _
    $region21: #{tpu_custom_call.1} parent=1 // pred_fallthru
      _
    // Predicated region
    $region22: #{tpu_custom_call.1} parent=1 // pred_check
      _
    $region23: #{tpu_custom_call.1} parent=1 // pred_check_branch
      %38 = sbr.rel (0) target = $region25
    $region24: #{tpu_custom_call.1} parent=1 // pred_region
      _
    $region25: #{tpu_custom_call.1} parent=1 // pred_fallthru
      _
    // Predicated region
    $region26: #{tpu_custom_call.1} parent=1 // pred_check
      _
    $region27: #{tpu_custom_call.1} parent=1 // pred_check_branch
      %40 = sbr.rel (0) target = $region29
    $region28: #{tpu_custom_call.1} parent=1 // pred_region
      _
    $region29: #{tpu_custom_call.1} parent=1 // pred_fallthru
      _
    // Predicated region
    $region30: #{tpu_custom_call.1} parent=1 // pred_check
      _
    $region31: #{tpu_custom_call.1} parent=1 // pred_check_branch
      %42 = sbr.rel (0) target = $region33
    $region32: #{tpu_custom_call.1} parent=1 // pred_region
      _
    $region33: #{tpu_custom_call.1} parent=1 // pred_fallthru
      _
    // Predicated region
    $region34: #{tpu_custom_call.1} parent=1 // pred_check
      _
    $region35: #{tpu_custom_call.1} parent=1 // pred_check_branch
      %44 = sbr.rel (0) target = $region37
    $region36: #{tpu_custom_call.1} parent=1 // pred_region
      _
    $region37: #{tpu_custom_call.1} parent=1 // pred_fallthru
      _
    // Predicated region
    $region38: #{tpu_custom_call.1} parent=1 // pred_check
      _
    $region39: #{tpu_custom_call.1} parent=1 // pred_check_branch
      %46 = sbr.rel (0) target = $region41
    $region40: #{tpu_custom_call.1} parent=1 // pred_region
      %48 = dma.done [#allocation3], 1024
    $region41: #{tpu_custom_call.1} parent=1 // pred_fallthru
      _
    %v49 = vld [vmem:[%s0] sm:$0xff]
    %v50 = vld [vmem:[#allocation2] sm:$0xff]
    %v51 = vld [vmem:[#allocation2 + $0x8] sm:$0xff]
    %v52 = vld [vmem:[#allocation2 + $0x10] sm:$0xff]
    %v53 = vld [vmem:[#allocation2 + $0x18] sm:$0xff]
    %v54 = vld [vmem:[#allocation2 + $0x20] sm:$0xff]
    %v55 = vld [vmem:[#allocation2 + $0x28] sm:$0xff]
    %v56 = vld [vmem:[#allocation2 + $0x30] sm:$0xff]
    %v57 = vld [vmem:[#allocation2 + $0x38] sm:$0xff]
    %v58 = vld [vmem:[%s2] sm:$0x3]
    %v60 = vperm.slane %v58, 0
    %v61 = vperm.slane %v58, 1
    %vm64 = vcmask 261120
    %v66 = vsel %vm64, %v49, 0
    %68 = vmatpush.msra.mxu0 0.0
    %69 = vmatpush.msra.mxu0 0.0
    %70 = vmatpush.msra.mxu0 0.0
    %71 = vmatpush.msra.mxu0 0.0
    %72 = vmatpush.msra.mxu0 0.0
    %73 = vmatpush.msra.mxu0 0.0
    %74 = vmatpush.msra.mxu0 0.0
    %75 = vmatpush.msra.mxu0 0.0
    %76 = vmatpush.msra.mxu0 0.0
    %77 = vmatpush.msra.mxu0 0.0
    %78 = vmatpush.msra.mxu0 0.0
    %79 = vmatpush.msra.mxu0 0.0
    %80 = vmatpush.msra.mxu0 %v56
    %81 = vmatpush.msra.mxu0 %v54
    %82 = vmatpush.msra.mxu0 %v52
    %83 = vmatpush.msra.mxu0 %v50
    %84 = vmatmul.f32.gmra.mxu0 %v66
    %v85 = vpop.f32.mrf.mxu0
    %v86 = vadd.f32 %v60, %v85
    %87 = vdwg.mxu0
    %88 = vmatpush.msra.mxu0 0.0
    %89 = vmatpush.msra.mxu0 0.0
    %90 = vmatpush.msra.mxu0 0.0
    %91 = vmatpush.msra.mxu0 0.0
    %92 = vmatpush.msra.mxu0 0.0
    %93 = vmatpush.msra.mxu0 0.0
    %94 = vmatpush.msra.mxu0 0.0
    %95 = vmatpush.msra.mxu0 0.0
    %96 = vmatpush.msra.mxu0 0.0
    %97 = vmatpush.msra.mxu0 0.0
    %98 = vmatpush.msra.mxu0 0.0
    %99 = vmatpush.msra.mxu0 0.0
    %100 = vmatpush.msra.mxu0 %v57
    %101 = vmatpush.msra.mxu0 %v55
    %102 = vmatpush.msra.mxu0 %v53
    %103 = vmatpush.msra.mxu0 %v51
    %104 = vmatmul.f32.gmra.mxu0 %v66
    %v105 = vpop.f32.mrf.mxu0
    %v106 = vadd.f32 %v61, %v105
    %107 = vdwg.mxu0
    %v108 = vmax.f32 %v86, 0.0
    %v109 = vmax.f32 %v106, 0.0
    %v110 = vld [vmem:[%s3] sm:$0xff]
    %v111 = vld [vmem:[%s3 + $0x8] sm:$0xff]
    %v112 = vld [vmem:[%s3 + $0x10] sm:$0xff]
    %v113 = vld [vmem:[%s3 + $0x18] sm:$0xff]
    %v114 = vld [vmem:[%s3 + $0x20] sm:$0xff]
    %v115 = vld [vmem:[%s3 + $0x28] sm:$0xff]
    %v116 = vld [vmem:[%s3 + $0x30] sm:$0xff]
    %v117 = vld [vmem:[%s3 + $0x38] sm:$0xff]
    %v118 = vld [vmem:[%s3 + $0x40] sm:$0xff]
    %v119 = vld [vmem:[%s3 + $0x48] sm:$0xff]
    %v120 = vld [vmem:[%s3 + $0x50] sm:$0xff]
    %v121 = vld [vmem:[%s3 + $0x58] sm:$0xff]
    %v122 = vld [vmem:[%s3 + $0x60] sm:$0xff]
    %v123 = vld [vmem:[%s3 + $0x68] sm:$0xff]
    %v124 = vld [vmem:[%s3 + $0x70] sm:$0xff]
    %v125 = vld [vmem:[%s3 + $0x78] sm:$0xff]
    %v126 = vld [vmem:[%s3 + $0x80] sm:$0xff]
    %v127 = vld [vmem:[%s3 + $0x88] sm:$0xff]
    %v128 = vld [vmem:[%s3 + $0x90] sm:$0xff]
    %v129 = vld [vmem:[%s3 + $0x98] sm:$0xff]
    %v130 = vld [vmem:[%s3 + $0xa0] sm:$0xff]
    %v131 = vld [vmem:[%s3 + $0xa8] sm:$0xff]
    %v132 = vld [vmem:[%s3 + $0xb0] sm:$0xff]
    %v133 = vld [vmem:[%s3 + $0xb8] sm:$0xff]
    %v134 = vld [vmem:[%s3 + $0xc0] sm:$0xff]
    %v135 = vld [vmem:[%s3 + $0xc8] sm:$0xff]
    %v136 = vld [vmem:[%s3 + $0xd0] sm:$0xff]
    %v137 = vld [vmem:[%s3 + $0xd8] sm:$0xff]
    %v138 = vld [vmem:[%s3 + $0xe0] sm:$0xff]
    %v139 = vld [vmem:[%s3 + $0xe8] sm:$0xff]
    %v140 = vld [vmem:[%s3 + $0xf0] sm:$0xff]
    %v141 = vld [vmem:[%s3 + $0xf8] sm:$0xff]
    %v142 = vld [vmem:[%s4] sm:$0x1]
    %v144 = vperm.slane %v142, 0
    %146 = vmatpush.msra.mxu0 %v125
    %147 = vmatpush.msra.mxu0 %v124
    %148 = vmatpush.msra.mxu0 %v123
    %149 = vmatpush.msra.mxu0 %v122
    %150 = vmatpush.msra.mxu0 %v121
    %151 = vmatpush.msra.mxu0 %v120
    %152 = vmatpush.msra.mxu0 %v119
    %153 = vmatpush.msra.mxu0 %v118
    %154 = vmatpush.msra.mxu0 %v117
    %155 = vmatpush.msra.mxu0 %v116
    %156 = vmatpush.msra.mxu0 %v115
    %157 = vmatpush.msra.mxu0 %v114
    %158 = vmatpush.msra.mxu0 %v113
    %159 = vmatpush.msra.mxu0 %v112
    %160 = vmatpush.msra.mxu0 %v111
    %161 = vmatpush.msra.mxu0 %v110
    %162 = vmatmul.f32.gmra.mxu0 %v108
    %v163 = vpop.f32.mrf.mxu0
    %v164 = vadd.f32 %v144, %v163
    %165 = vdwg.mxu0
    %166 = vmatpush.msra.mxu0 %v141
    %167 = vmatpush.msra.mxu0 %v140
    %168 = vmatpush.msra.mxu0 %v139
    %169 = vmatpush.msra.mxu0 %v138
    %170 = vmatpush.msra.mxu0 %v137
    %171 = vmatpush.msra.mxu0 %v136
    %172 = vmatpush.msra.mxu0 %v135
    %173 = vmatpush.msra.mxu0 %v134
    %174 = vmatpush.msra.mxu0 %v133
    %175 = vmatpush.msra.mxu0 %v132
    %176 = vmatpush.msra.mxu0 %v131
    %177 = vmatpush.msra.mxu0 %v130
    %178 = vmatpush.msra.mxu0 %v129
    %179 = vmatpush.msra.mxu0 %v128
    %180 = vmatpush.msra.mxu0 %v127
    %181 = vmatpush.msra.mxu0 %v126
    %182 = vmatmul.f32.gmra.mxu0 %v109
    %v183 = vpop.f32.mrf.mxu0
    %v184 = vadd.f32 %v164, %v183
    %185 = vdwg.mxu0
    %v186 = vmax.f32 %v184, 0.0
    %v187 = vld [vmem:[%s5] sm:$0xff]
    %v188 = vld [vmem:[%s5 + $0x8] sm:$0xff]
    %v189 = vld [vmem:[%s5 + $0x10] sm:$0xff]
    %v190 = vld [vmem:[%s5 + $0x18] sm:$0xff]
    %v191 = vld [vmem:[%s5 + $0x20] sm:$0xff]
    %v192 = vld [vmem:[%s5 + $0x28] sm:$0xff]
    %v193 = vld [vmem:[%s5 + $0x30] sm:$0xff]
    %v194 = vld [vmem:[%s5 + $0x38] sm:$0xff]
    %v195 = vld [vmem:[%s5 + $0x40] sm:$0xff]
    %v196 = vld [vmem:[%s5 + $0x48] sm:$0xff]
    %v197 = vld [vmem:[%s5 + $0x50] sm:$0xff]
    %v198 = vld [vmem:[%s5 + $0x58] sm:$0xff]
    %v199 = vld [vmem:[%s5 + $0x60] sm:$0xff]
    %v200 = vld [vmem:[%s5 + $0x68] sm:$0xff]
    %v201 = vld [vmem:[%s5 + $0x70] sm:$0xff]
    %v202 = vld [vmem:[%s5 + $0x78] sm:$0xff]
    %v203 = vld [vmem:[%s6] sm:$0x1]
    %v205 = vperm.slane %v203, 0
    %207 = vmatpush.msra.mxu0 %v202
    %208 = vmatpush.msra.mxu0 %v201
    %209 = vmatpush.msra.mxu0 %v200
    %210 = vmatpush.msra.mxu0 %v199
    %211 = vmatpush.msra.mxu0 %v198
    %212 = vmatpush.msra.mxu0 %v197
    %213 = vmatpush.msra.mxu0 %v196
    %214 = vmatpush.msra.mxu0 %v195
    %215 = vmatpush.msra.mxu0 %v194
    %216 = vmatpush.msra.mxu0 %v193
    %217 = vmatpush.msra.mxu0 %v192
    %218 = vmatpush.msra.mxu0 %v191
    %219 = vmatpush.msra.mxu0 %v190
    %220 = vmatpush.msra.mxu0 %v189
    %221 = vmatpush.msra.mxu0 %v188
    %222 = vmatpush.msra.mxu0 %v187
    %223 = vmatmul.f32.gmra.mxu0 %v186
    %v224 = vpop.f32.mrf.mxu0
    %v225 = vadd.f32 %v205, %v224
    %226 = vdwg.mxu0
    %v227 = vmax.f32 %v225, 0.0
    %v228 = vld [vmem:[%s7] sm:$0xff]
    %v229 = vld [vmem:[%s7 + $0x8] sm:$0xff]
    %v230 = vld [vmem:[%s7 + $0x10] sm:$0xff]
    %v231 = vld [vmem:[%s7 + $0x18] sm:$0xff]
    %v232 = vld [vmem:[%s7 + $0x20] sm:$0xff]
    %v233 = vld [vmem:[%s7 + $0x28] sm:$0xff]
    %v234 = vld [vmem:[%s7 + $0x30] sm:$0xff]
    %v235 = vld [vmem:[%s7 + $0x38] sm:$0xff]
    %v236 = vld [vmem:[%s8] sm:$0x1]
    %v238 = vperm.slane %v236, 0
    %vm240 = vcmask 523264
    %v242 = vsel %vm240, %v227, 0
    %244 = vmatpush.msra.mxu0 0.0
    %245 = vmatpush.msra.mxu0 0.0
    %246 = vmatpush.msra.mxu0 0.0
    %247 = vmatpush.msra.mxu0 0.0
    %248 = vmatpush.msra.mxu0 0.0
    %249 = vmatpush.msra.mxu0 0.0
    %250 = vmatpush.msra.mxu0 0.0
    %251 = vmatpush.msra.mxu0 0.0
    %252 = vmatpush.msra.mxu0 %v235
    %253 = vmatpush.msra.mxu0 %v234
    %254 = vmatpush.msra.mxu0 %v233
    %255 = vmatpush.msra.mxu0 %v232
    %256 = vmatpush.msra.mxu0 %v231
    %257 = vmatpush.msra.mxu0 %v230
    %258 = vmatpush.msra.mxu0 %v229
    %259 = vmatpush.msra.mxu0 %v228
    %260 = vmatmul.f32.gmra.mxu0 %v242
    %v261 = vpop.f32.mrf.mxu0
    %v262 = vadd.f32 %v238, %v261
    %263 = vdwg.mxu0
    %vm264 = vcmask 64512
    %265 = vst.msk [vmem:[#allocation5] sm:$0xff] %vm264, %v262
    // Predicated region
    $region42: #{tpu_custom_call.1} parent=1 // pred_check
      _
    $region43: #{tpu_custom_call.1} parent=1 // pred_check_branch
      %267 = sbr.rel (0) target = $region45
    $region44: #{tpu_custom_call.1} parent=1 // pred_region
      %269 = vsyncadd [#allocation4], 96
      %s270 = sshll.u32 [#allocation5], 4
      %s271 = int_to_ptr.vmem [resolvable:$true] %s270
      %s272 = sshll.u32 %s9, 4
      %s273 = int_to_ptr.hbm [resolvable:$true] %s272
      %278 = dma.vmem_to_hbm [thread:$0]  %s271, 32, %s273, [#allocation4], 32, 32, 2
    $region45: #{tpu_custom_call.1} parent=1 // pred_fallthru
      _
    // Predicated region
    $region46: #{tpu_custom_call.1} parent=1 // pred_check
      _
    $region47: #{tpu_custom_call.1} parent=1 // pred_check_branch
      %280 = sbr.rel (0) target = $region49
    $region48: #{tpu_custom_call.1} parent=1 // pred_region
      %282 = dma.done [#allocation4], 128
    $region49: #{tpu_custom_call.1} parent=1 // pred_fallthru
      _
    %283 = vsyncpa [#allocation3], 1
    %284 = vsyncpa [#allocation4], 1

</llo_original>
